<compile_context>
chip_gen: v5e
topology: v5e:2x2
jax: 0.10.0
libtpu: 0.0.40
codegen_flags: <defaults>
</compile_context>

<pallas_src>
import numpy as np
import jax
import jax.numpy as jnp
from jax.experimental import pallas as pl
from jax.experimental.pallas import tpu as pltpu

# ----- Net defaults (from the PyTorch __init__) -----
M = 1000
C_1 = 0.001
# noise_schedule='linear', pred_type='EPSILON', amp=False

# ----- synthetic inner-model / problem sizes -----
BATCH = 2
IMG_CH = 4
IMG_RES = 16
HID = 32
EMB = 16
U_PAD = 1024          # M+1 = 1001 padded up; stored as (8, 128) = one vreg


def _build_u_table():
    """Replicates Net.__init__ u-buffer construction (linear beta schedule)."""
    betas = np.linspace(1e-4, 0.02, M + 1, dtype=np.float64)
    alphas_cumprod = np.cumprod(1.0 - betas)

    def alpha_bar(j):
        return alphas_cumprod[M - j]

    u = np.zeros(M + 1, dtype=np.float64)
    for j in range(M, 0, -1):
        ratio = max(alpha_bar(j - 1) / alpha_bar(j), C_1)
        u[j - 1] = np.sqrt((u[j] ** 2 + 1.0) / ratio - 1.0)
    return u.astype(np.float32)


def init_params(key):
    u = _build_u_table()
    u_flat = np.full((U_PAD,), 1e30, dtype=np.float32)   # padding never wins argmin
    u_flat[: M + 1] = u
    u_pad8 = u_flat.reshape(8, 128)                       # packed: 1 full vreg
    freqs = ((np.arange(EMB, dtype=np.float32) + 1.0) / (EMB * M)).reshape(1, EMB)
    k1, k2, k3 = jax.random.split(key, 3)
    w1 = 0.1 * jax.random.normal(k1, (9 * IMG_CH, HID), jnp.float32)  # 3x3 conv (im2col)
    b1 = jnp.zeros((1, HID), jnp.float32)
    we = 0.1 * jax.random.normal(k2, (EMB, HID), jnp.float32)         # timestep embed
    be = jnp.zeros((1, HID), jnp.float32)
    w2 = 0.1 * jax.random.normal(k3, (HID, IMG_CH), jnp.float32)      # 1x1 conv
    b2 = jnp.zeros((1, IMG_CH), jnp.float32)
    params = dict(u_pad8=jnp.asarray(u_pad8), freqs=jnp.asarray(freqs),
                  w1=w1, b1=b1, we=we, be=be, w2=w2, b2=b2)
    # Kernel-layout variants: feature-major (transposed) so the pixel axis is
    # lane-dense inside the kernel; bf16 where it feeds the MXU dots.
    params.update(
        w1T=jnp.transpose(w1).astype(jnp.bfloat16),   # (HID, 9C) bf16
        weT=jnp.transpose(we),                        # (HID, EMB) f32
        bias_hT=jnp.transpose(b1 + be),               # (HID, 1)   f32 (conv + emb bias)
        w2T=jnp.transpose(w2).astype(jnp.bfloat16),   # (C, HID)   bf16
        b2T=jnp.transpose(b2),                        # (C, 1)     f32
    )
    return params


def edm_net_kernel(sigma_sm,                     # (B,) f32 scalar-prefetch (SMEM)
                   xcolT_ref, xT_ref,            # (9C, TILE) bf16 / (C, TILE) f32
                   u_ref, freqs_ref,             # (8, 128)   / (1, EMB)
                   w1T_ref, weT_ref, bias_hT_ref, w2T_ref, b2T_ref,
                   out_ref):                     # (C, TILE) f32
    b = pl.program_id(0)
    sig = jnp.full((1, 1), sigma_sm[b], jnp.float32)          # per-batch sigma
    c_in = jax.lax.rsqrt(sig * sig + 1.0)                     # 1/sqrt(sigma^2+1)

    # round_sigma(sigma, return_index=True): nearest-u argmin, first tie wins.
    # With tile == H*W this runs exactly once per batch; the u-table is packed
    # (8, 128) so the whole reduction lives in a single vreg.
    d = jnp.abs(sig - u_ref[...])                             # (8, 128)
    dmin = jnp.min(jnp.min(d, axis=1, keepdims=True), axis=0, keepdims=True)
    row = jax.lax.broadcasted_iota(jnp.int32, d.shape, 0)
    col = jax.lax.broadcasted_iota(jnp.int32, d.shape, 1)
    flat = row * 128 + col
    masked = jnp.where(d <= dmin, flat, jnp.int32(2 ** 30))
    idx = jnp.min(jnp.min(masked, axis=1, keepdims=True), axis=0, keepdims=True)
    c_noise = (M - 1) - idx.astype(jnp.float32)               # (1, 1)

    # timestep embedding collapsed to a per-batch (HID, 1) bias column
    feat = jnp.exp(-c_noise * freqs_ref[...])                 # (1, EMB)
    emb = jnp.sum(weT_ref[...] * feat, axis=1, keepdims=True) # (HID, 1)
    bias = bias_hT_ref[...] + emb                             # (HID, 1)

    # inner model, feature-major so the pixel axis (TILE) is lane-dense.
    # 3x3 conv as im2col matmul (bf16 MXU, f32 accumulation); c_in is a scalar
    # per batch so it commutes with the matmul and scales the accumulator.
    hT = c_in * jnp.dot(w1T_ref[...], xcolT_ref[...],
                        preferred_element_type=jnp.float32) + bias    # (HID, TILE)
    hT = hT * jax.nn.sigmoid(hT)                                      # SiLU (f32)
    fT = jnp.dot(w2T_ref[...], hT.astype(jnp.bfloat16),
                 preferred_element_type=jnp.float32) + b2T_ref[...]   # (C, TILE)

    # EPSILON preconditioning: c_skip = 1, c_out = -sigma  =>  D_x = x - sigma * F_x
    out_ref[...] = xT_ref[...] - sig * fT


def edm_net_forward(x_nchw, sigma, params, tile=None):
    """Net.forward for pred_type='EPSILON', amp=False, guidance_scale=1.0."""
    B, C, H, W = x_nchw.shape
    HW = H * W
    # Default: whole image per grid step (grid has exactly B steps).  B >= 2 keeps
    # both v7x TensorCores busy via the "parallel" batch axis; on v5e/v6e minimum
    # step count is strictly best.  For much larger images pick the largest TILE
    # (multiple of 128 dividing HW) whose double-buffered bf16 (9C, TILE) stream
    # stays under the scoped-VMEM default (v7x: 32 MiB of 64 MiB physical).
    if tile is None:
        tile = HW
    assert HW % tile == 0 and tile % 128 == 0
    tpb = HW // tile
    kcol = 9 * C

    # ----- NCHW-native wrapper-side layout (no XLA transposes) -----
    # TODO(synk): on v5e (lowest HBM BW) replace the 9x-expanded im2col stream with an
    # in-kernel shifted-window conv (raw NCHW slab + 9 small dots) once P is DMA-bound.
    x32 = x_nchw.astype(jnp.float32)
    xT = x32.reshape(B, C, HW)                                          # free reshape
    xp = jnp.pad(x32, ((0, 0), (0, 0), (1, 1), (1, 1)))
    cols = [xp[:, :, di:di + H, dj:dj + W].reshape(B, C, HW)
            for di in range(3) for dj in range(3)]
    xcolT = jnp.concatenate(cols, axis=1).astype(jnp.bfloat16)          # (B, 9C, HW)
    sig_b = sigma.astype(jnp.float32).reshape(B)

    P = B * HW
    cost = pl.CostEstimate(
        flops=2 * P * HID * (kcol + C) + 4 * P * HID,
        transcendentals=P * HID,
        bytes_accessed=xcolT.size * 2 + 2 * P * C * 4
                       + 2 * HID * (kcol + C) + 4 * HID * (EMB + 1) + 4 * U_PAD)

    out = pl.pallas_call(
        edm_net_kernel,
        out_shape=jax.ShapeDtypeStruct((B, C, HW), jnp.float32),
        grid_spec=pltpu.PrefetchScalarGridSpec(
            num_scalar_prefetch=1,                       # sigma -> SMEM
            grid=(B, tpb),                               # tpb == 1 at default tile
            in_specs=[
                pl.BlockSpec((None, kcol, tile), lambda b, t, s: (b, 0, t)),  # xcolT
                pl.BlockSpec((None, C, tile),    lambda b, t, s: (b, 0, t)),  # xT
                pl.BlockSpec((8, 128),           lambda b, t, s: (0, 0)),     # u table
                pl.BlockSpec((1, EMB),           lambda b, t, s: (0, 0)),     # freqs
                pl.BlockSpec((HID, kcol),        lambda b, t, s: (0, 0)),     # w1T
                pl.BlockSpec((HID, EMB),         lambda b, t, s: (0, 0)),     # weT
                pl.BlockSpec((HID, 1),           lambda b, t, s: (0, 0)),     # b1+be
                pl.BlockSpec((C, HID),           lambda b, t, s: (0, 0)),     # w2T
                pl.BlockSpec((C, 1),             lambda b, t, s: (0, 0)),     # b2T
            ],
            out_specs=pl.BlockSpec((None, C, tile), lambda b, t, s: (b, 0, t)),
        ),
        compiler_params=pltpu.CompilerParams(
            dimension_semantics=("parallel", "parallel")),
        cost_estimate=cost,
    )(sig_b, xcolT, xT,
      params["u_pad8"], params["freqs"],
      params["w1T"], params["weT"], params["bias_hT"], params["w2T"], params["b2T"])

    return out.reshape(B, C, H, W)                                      # free reshape


def reference_forward(x_nchw, sigma, params):
    """Pure-JAX f32 reference of the same forward pass (for validation)."""
    B, C, H, W = x_nchw.shape
    P = B * H * W
    x = x_nchw.astype(jnp.float32)
    sig4 = sigma.astype(jnp.float32).reshape(B, 1, 1, 1)
    c_in = 1.0 / jnp.sqrt(sig4 ** 2 + 1.0)
    u = params["u_pad8"].reshape(-1)[: M + 1]
    idx = jnp.argmin(jnp.abs(sigma.reshape(B, 1) - u[None, :]), axis=1)
    c_noise = (M - 1) - idx.astype(jnp.float32)

    xin = jnp.transpose(c_in * x, (0, 2, 3, 1))
    xp = jnp.pad(xin, ((0, 0), (1, 1), (1, 1), (0, 0)))
    cols = [xp[:, di:di + H, dj:dj + W, :].reshape(P, C)
            for di in range(3) for dj in range(3)]
    xcol = jnp.concatenate(cols, axis=1)
    h = xcol @ params["w1"] + params["b1"]
    c_noise_rows = jnp.repeat(c_noise, H * W).reshape(P, 1)
    feat = jnp.exp(-c_noise_rows * params["freqs"])
    h = h + feat @ params["we"] + params["be"]
    h = h * jax.nn.sigmoid(h)
    f = (h @ params["w2"] + params["b2"]).reshape(B, H, W, C)
    f = jnp.transpose(f, (0, 3, 1, 2))
    return x - sig4 * f


# TODO(synk): classifier-free-guidance branch (guidance_scale != 1.0 split/cat) and the
# fp16 autocast path (amp=True) are not exercised; default guidance=1.0 / fp32 path only.

if __name__ == "__main__":
    key = jax.random.PRNGKey(0)
    kx, ks, kp = jax.random.split(key, 3)
    x = jax.random.normal(kx, (BATCH, IMG_CH, IMG_RES, IMG_RES), jnp.float32)
    sigma = jax.random.uniform(ks, (BATCH,), jnp.float32, 0.5, 5.0)
    params = init_params(kp)

    out = edm_net_forward(x, sigma, params)
    out = jax.block_until_ready(out)

    ref = reference_forward(x, sigma, params)
    assert out.shape == x.shape
    assert bool(jnp.all(jnp.isfinite(out)))
    err = float(jnp.max(jnp.abs(out - ref)))
    assert bool(jnp.allclose(out, ref, rtol=5e-2, atol=5e-2)), err
    print("KERNEL_OK")
</pallas_src>

<mosaic_0001>
module attributes {stable_mosaic.version = 11 : i64} {
  func.func @edm_net_kernel(%arg0: i32, %arg1: i32, %arg2: memref<2xf32, #tpu.memory_space<smem>>, %arg3: memref<1x36x256xbf16, #tpu.memory_space<vmem>>, %arg4: memref<1x4x256xf32, #tpu.memory_space<vmem>>, %arg5: memref<8x128xf32, #tpu.memory_space<vmem>>, %arg6: memref<1x16xf32, #tpu.memory_space<vmem>>, %arg7: memref<32x36xbf16, #tpu.memory_space<vmem>>, %arg8: memref<32x16xf32, #tpu.memory_space<vmem>>, %arg9: memref<32x1xf32, #tpu.memory_space<vmem>>, %arg10: memref<4x32xbf16, #tpu.memory_space<vmem>>, %arg11: memref<4x1xf32, #tpu.memory_space<vmem>>, %arg12: memref<1x4x256xf32, #tpu.memory_space<vmem>>) attributes {dimension_semantics = [#tpu.dimension_semantics<parallel>, #tpu.dimension_semantics<parallel>], iteration_bounds = array<i64: 2, 1>, scalar_prefetch = 1 : i64, scratch_operands = 0 : i64, tpu.core_type = #tpu.core_type<tc>, window_params = [{transform_indices = @transform_0, window_bounds = array<i64: 1, 36, 256>}, {transform_indices = @transform_1, window_bounds = array<i64: 1, 4, 256>}, {pipeline_mode = #tpu.pipeline_mode<synchronous>, transform_indices = @transform_2, window_bounds = array<i64: 8, 128>}, {pipeline_mode = #tpu.pipeline_mode<synchronous>, transform_indices = @transform_3, window_bounds = array<i64: 1, 16>}, {pipeline_mode = #tpu.pipeline_mode<synchronous>, transform_indices = @transform_4, window_bounds = array<i64: 32, 36>}, {pipeline_mode = #tpu.pipeline_mode<synchronous>, transform_indices = @transform_5, window_bounds = array<i64: 32, 16>}, {pipeline_mode = #tpu.pipeline_mode<synchronous>, transform_indices = @transform_6, window_bounds = array<i64: 32, 1>}, {pipeline_mode = #tpu.pipeline_mode<synchronous>, transform_indices = @transform_7, window_bounds = array<i64: 4, 32>}, {pipeline_mode = #tpu.pipeline_mode<synchronous>, transform_indices = @transform_8, window_bounds = array<i64: 4, 1>}, {transform_indices = @transform_9, window_bounds = array<i64: 1, 4, 256>}]} {
    %0 = arith.index_cast %arg0 : i32 to index
    %1 = memref.load %arg2[%0] : memref<2xf32, #tpu.memory_space<smem>>
    %2 = vector.broadcast %1 : f32 to vector<1x1xf32>
    %3 = arith.mulf %2, %2 : vector<1x1xf32>
    %cst = arith.constant 1.000000e+00 : f32
    %4 = vector.broadcast %cst : f32 to vector<1x1xf32>
    %5 = arith.addf %3, %4 : vector<1x1xf32>
    %6 = math.rsqrt %5 : vector<1x1xf32>
    %c0 = arith.constant 0 : index
    %c0_0 = arith.constant 0 : index
    %7 = vector.load %arg5[%c0, %c0_0] : memref<8x128xf32, #tpu.memory_space<vmem>>, vector<8x128xf32>
    %8 = vector.broadcast %2 : vector<1x1xf32> to vector<8x128xf32>
    %9 = arith.subf %8, %7 : vector<8x128xf32>
    %10 = math.absf %9 : vector<8x128xf32>
    %cst_1 = arith.constant dense<0x7F800000> : vector<8xf32>
    %11 = vector.multi_reduction <minimumf>, %10, %cst_1 [1] : vector<8x128xf32> to vector<8xf32>
    %12 = vector.shape_cast %11 : vector<8xf32> to vector<8x1xf32>
    %cst_2 = arith.constant dense<0x7F800000> : vector<1xf32>
    %13 = vector.multi_reduction <minimumf>, %12, %cst_2 [0] : vector<8x1xf32> to vector<1xf32>
    %14 = vector.shape_cast %13 : vector<1xf32> to vector<1x1xf32>
    %15 = tpu.iota {dimensions = array<i32: 0>} : vector<8x128xi32>
    %16 = tpu.iota {dimensions = array<i32: 1>} : vector<8x128xi32>
    %c128_i32 = arith.constant 128 : i32
    %17 = vector.broadcast %c128_i32 : i32 to vector<8x128xi32>
    %18 = arith.muli %15, %17 : vector<8x128xi32>
    %19 = arith.addi %18, %16 : vector<8x128xi32>
    %20 = vector.broadcast %14 : vector<1x1xf32> to vector<8x128xf32>
    %21 = arith.cmpf ole, %10, %20 : vector<8x128xf32>
    %c1073741824_i32 = arith.constant 1073741824 : i32
    %22 = vector.broadcast %c1073741824_i32 : i32 to vector<8x128xi32>
    %23 = arith.select %21, %19, %22 : vector<8x128xi1>, vector<8x128xi32>
    %cst_3 = arith.constant dense<2147483647> : vector<8xi32>
    %24 = vector.multi_reduction <minsi>, %23, %cst_3 [1] : vector<8x128xi32> to vector<8xi32>
    %25 = vector.shape_cast %24 : vector<8xi32> to vector<8x1xi32>
    %cst_4 = arith.constant dense<2147483647> : vector<1xi32>
    %26 = vector.multi_reduction <minsi>, %25, %cst_4 [0] : vector<8x1xi32> to vector<1xi32>
    %27 = vector.shape_cast %26 : vector<1xi32> to vector<1x1xi32>
    %28 = arith.sitofp %27 : vector<1x1xi32> to vector<1x1xf32>
    %cst_5 = arith.constant 9.990000e+02 : f32
    %29 = vector.broadcast %cst_5 : f32 to vector<1x1xf32>
    %30 = arith.subf %29, %28 : vector<1x1xf32>
    %cst_6 = arith.constant 0.000000e+00 : f32
    %31 = vector.broadcast %cst_6 : f32 to vector<1x1xf32>
    %32 = arith.subf %31, %30 : vector<1x1xf32>
    %c0_7 = arith.constant 0 : index
    %c0_8 = arith.constant 0 : index
    %33 = vector.load %arg6[%c0_7, %c0_8] : memref<1x16xf32, #tpu.memory_space<vmem>>, vector<1x16xf32>
    %34 = vector.broadcast %32 : vector<1x1xf32> to vector<1x16xf32>
    %35 = arith.mulf %34, %33 : vector<1x16xf32>
    %36 = math.exp %35 : vector<1x16xf32>
    %c0_9 = arith.constant 0 : index
    %c0_10 = arith.constant 0 : index
    %37 = vector.load %arg8[%c0_9, %c0_10] : memref<32x16xf32, #tpu.memory_space<vmem>>, vector<32x16xf32>
    %38 = vector.broadcast %36 : vector<1x16xf32> to vector<32x16xf32>
    %39 = arith.mulf %37, %38 : vector<32x16xf32>
    %cst_11 = arith.constant dense<0.000000e+00> : vector<32xf32>
    %40 = vector.multi_reduction <add>, %39, %cst_11 [1] : vector<32x16xf32> to vector<32xf32>
    %41 = vector.shape_cast %40 : vector<32xf32> to vector<32x1xf32>
    %c0_12 = arith.constant 0 : index
    %c0_13 = arith.constant 0 : index
    %42 = vector.load %arg9[%c0_12, %c0_13] : memref<32x1xf32, #tpu.memory_space<vmem>>, vector<32x1xf32>
    %43 = arith.addf %42, %41 : vector<32x1xf32>
    %c0_14 = arith.constant 0 : index
    %c0_15 = arith.constant 0 : index
    %44 = vector.load %arg7[%c0_14, %c0_15] : memref<32x36xbf16, #tpu.memory_space<vmem>>, vector<32x36xbf16>
    %c0_16 = arith.constant 0 : index
    %c0_17 = arith.constant 0 : index
    %c0_18 = arith.constant 0 : index
    %45 = vector.load %arg3[%c0_16, %c0_17, %c0_18] : memref<1x36x256xbf16, #tpu.memory_space<vmem>>, vector<1x36x256xbf16>
    %46 = vector.shape_cast %45 : vector<1x36x256xbf16> to vector<36x256xbf16>
    %cst_19 = arith.constant dense<0.000000e+00> : vector<32x256xf32>
    %47 = tpu.matmul %44, %46, %cst_19 {dimension_numbers = #tpu.dot_dimension_numbers<[1], [0], [0], [1], [0, 0, 1, 1], [], []>} : vector<32x36xbf16>, vector<36x256xbf16>, vector<32x256xf32> -> vector<32x256xf32>
    %48 = vector.broadcast %6 : vector<1x1xf32> to vector<32x256xf32>
    %49 = arith.mulf %48, %47 : vector<32x256xf32>
    %50 = vector.broadcast %43 : vector<32x1xf32> to vector<32x256xf32>
    %51 = arith.addf %49, %50 : vector<32x256xf32>
    %52 = arith.negf %51 : vector<32x256xf32>
    %53 = math.exp %52 : vector<32x256xf32>
    %cst_20 = arith.constant 1.000000e+00 : f32
    %54 = vector.broadcast %cst_20 : f32 to vector<32x256xf32>
    %55 = arith.addf %54, %53 : vector<32x256xf32>
    %56 = arith.divf %54, %55 : vector<32x256xf32>
    %57 = arith.mulf %51, %56 : vector<32x256xf32>
    %c0_21 = arith.constant 0 : index
    %c0_22 = arith.constant 0 : index
    %58 = vector.load %arg10[%c0_21, %c0_22] : memref<4x32xbf16, #tpu.memory_space<vmem>>, vector<4x32xbf16>
    %59 = arith.truncf %57 : vector<32x256xf32> to vector<32x256xbf16>
    %cst_23 = arith.constant dense<0.000000e+00> : vector<4x256xf32>
    %60 = tpu.matmul %58, %59, %cst_23 {dimension_numbers = #tpu.dot_dimension_numbers<[1], [0], [0], [1], [0, 0, 1, 1], [], []>} : vector<4x32xbf16>, vector<32x256xbf16>, vector<4x256xf32> -> vector<4x256xf32>
    %c0_24 = arith.constant 0 : index
    %c0_25 = arith.constant 0 : index
    %61 = vector.load %arg11[%c0_24, %c0_25] : memref<4x1xf32, #tpu.memory_space<vmem>>, vector<4x1xf32>
    %62 = vector.broadcast %61 : vector<4x1xf32> to vector<4x256xf32>
    %63 = arith.addf %60, %62 : vector<4x256xf32>
    %c0_26 = arith.constant 0 : index
    %c0_27 = arith.constant 0 : index
    %c0_28 = arith.constant 0 : index
    %64 = vector.load %arg4[%c0_26, %c0_27, %c0_28] : memref<1x4x256xf32, #tpu.memory_space<vmem>>, vector<1x4x256xf32>
    %65 = vector.shape_cast %64 : vector<1x4x256xf32> to vector<4x256xf32>
    %66 = vector.broadcast %2 : vector<1x1xf32> to vector<4x256xf32>
    %67 = arith.mulf %66, %63 : vector<4x256xf32>
    %68 = arith.subf %65, %67 : vector<4x256xf32>
    %c0_29 = arith.constant 0 : index
    %c0_30 = arith.constant 0 : index
    %c0_31 = arith.constant 0 : index
    %69 = vector.load %arg12[%c0_29, %c0_30, %c0_31] : memref<1x4x256xf32, #tpu.memory_space<vmem>>, vector<1x4x256xf32>
    %70 = vector.shape_cast %69 : vector<1x4x256xf32> to vector<4x256xf32>
    %71 = vector.shape_cast %68 : vector<4x256xf32> to vector<1x4x256xf32>
    tpu.vector_store %arg12[%c0_29, %c0_30, %c0_31], %71 {strides = array<i32>} : memref<1x4x256xf32, #tpu.memory_space<vmem>>, vector<1x4x256xf32>,
    return
  }
  func.func @transform_0(%arg0: i32, %arg1: i32, %arg2: memref<2xf32, #tpu.memory_space<smem>>) -> (i32, i32, i32) {
    %c0_i32 = arith.constant 0 : i32
    %c0_i32_0 = arith.constant 0 : i32
    return %arg0, %c0_i32, %arg1 : i32, i32, i32
  }
  func.func @transform_1(%arg0: i32, %arg1: i32, %arg2: memref<2xf32, #tpu.memory_space<smem>>) -> (i32, i32, i32) {
    %c0_i32 = arith.constant 0 : i32
    %c0_i32_0 = arith.constant 0 : i32
    return %arg0, %c0_i32, %arg1 : i32, i32, i32
  }
  func.func @transform_2(%arg0: i32, %arg1: i32, %arg2: memref<2xf32, #tpu.memory_space<smem>>) -> (i32, i32) {
    %c0_i32 = arith.constant 0 : i32
    %c0_i32_0 = arith.constant 0 : i32
    %c0_i32_1 = arith.constant 0 : i32
    return %c0_i32, %c0_i32_0 : i32, i32
  }
  func.func @transform_3(%arg0: i32, %arg1: i32, %arg2: memref<2xf32, #tpu.memory_space<smem>>) -> (i32, i32) {
    %c0_i32 = arith.constant 0 : i32
    %c0_i32_0 = arith.constant 0 : i32
    %c0_i32_1 = arith.constant 0 : i32
    return %c0_i32, %c0_i32_0 : i32, i32
  }
  func.func @transform_4(%arg0: i32, %arg1: i32, %arg2: memref<2xf32, #tpu.memory_space<smem>>) -> (i32, i32) {
    %c0_i32 = arith.constant 0 : i32
    %c0_i32_0 = arith.constant 0 : i32
    %c0_i32_1 = arith.constant 0 : i32
    return %c0_i32, %c0_i32_0 : i32, i32
  }
  func.func @transform_5(%arg0: i32, %arg1: i32, %arg2: memref<2xf32, #tpu.memory_space<smem>>) -> (i32, i32) {
    %c0_i32 = arith.constant 0 : i32
    %c0_i32_0 = arith.constant 0 : i32
    %c0_i32_1 = arith.constant 0 : i32
    return %c0_i32, %c0_i32_0 : i32, i32
  }
  func.func @transform_6(%arg0: i32, %arg1: i32, %arg2: memref<2xf32, #tpu.memory_space<smem>>) -> (i32, i32) {
    %c0_i32 = arith.constant 0 : i32
    %c0_i32_0 = arith.constant 0 : i32
    %c0_i32_1 = arith.constant 0 : i32
    return %c0_i32, %c0_i32_0 : i32, i32
  }
  func.func @transform_7(%arg0: i32, %arg1: i32, %arg2: memref<2xf32, #tpu.memory_space<smem>>) -> (i32, i32) {
    %c0_i32 = arith.constant 0 : i32
    %c0_i32_0 = arith.constant 0 : i32
    %c0_i32_1 = arith.constant 0 : i32
    return %c0_i32, %c0_i32_0 : i32, i32
  }
  func.func @transform_8(%arg0: i32, %arg1: i32, %arg2: memref<2xf32, #tpu.memory_space<smem>>) -> (i32, i32) {
    %c0_i32 = arith.constant 0 : i32
    %c0_i32_0 = arith.constant 0 : i32
    %c0_i32_1 = arith.constant 0 : i32
    return %c0_i32, %c0_i32_0 : i32, i32
  }
  func.func @transform_9(%arg0: i32, %arg1: i32, %arg2: memref<2xf32, #tpu.memory_space<smem>>) -> (i32, i32, i32) {
    %c0_i32 = arith.constant 0 : i32
    %c0_i32_0 = arith.constant 0 : i32
    return %arg0, %c0_i32, %arg1 : i32, i32, i32
  }
}

</mosaic_0001>

<llo_original>
// kernel: tpu_custom_call.1
$region0: #{tpu_custom_call.1}
  #allocation0 [shape = 'u32[]', space=smem, size = 0x4, offset = 0x4, fixed_abs, tag = 'smem constant byte address 0x4 - core index']
  #allocation1 [shape = 'u32[72,128]{1,0:T(1,128)}', space=vmem, size = 0x9000, scoped, tag = 'internal scratch']
  #allocation2 [shape = 's32[1]{0}', space=sflag, size = 0x4, scoped, tag = 'scoped memory for tpu_custom_call.1']
  #allocation3 [shape = 'u8[512]{0}', space=smem, size = 0x200, scoped, tag = 'prefetched SMEM operand 0']
  %s0 = inlined_call_operand.vmem [shape: f32[2], index: 0, kind: input, shape index: {}]
  %s1 = inlined_call_operand.vmem [shape: bf16[2,36,256], index: 1, kind: input, shape index: {}]
  %s2 = inlined_call_operand.vmem [shape: f32[2,4,256], index: 2, kind: input, shape index: {}]
  %s3 = inlined_call_operand.vmem [shape: f32[8,128], index: 3, kind: input, shape index: {}]
  %s4 = inlined_call_operand.vmem [shape: f32[1,16], index: 4, kind: input, shape index: {}]
  %s5 = inlined_call_operand.vmem [shape: bf16[32,36], index: 5, kind: input, shape index: {}]
  %s6 = inlined_call_operand.vmem [shape: f32[32,16], index: 6, kind: input, shape index: {}]
  %s7 = inlined_call_operand.vmem [shape: f32[32,1], index: 7, kind: input, shape index: {}]
  %s8 = inlined_call_operand.vmem [shape: bf16[4,32], index: 8, kind: input, shape index: {}]
  %s9 = inlined_call_operand.vmem [shape: f32[4,1], index: 9, kind: input, shape index: {}]
  %s10 = inlined_call_operand.hbm [shape: f32[2,4,256], index: 10, kind: output, shape index: {}]
  %s11 = sld [smem:[#allocation0]]
  $region69: #{tpu_custom_call.1} parent=0
    _
  %s13 = ssub.s32 1, %s11
  %s14 = scalar_select 0, %s13, %s11
  %s16 = sshll.u32 %s0, 4
  %s17 = int_to_ptr.vmem [resolvable:$true] %s16
  %19 = dma.vmem_to_smem %s17, 16, [#allocation3], [#allocation2]
  %21 = dma.done [#allocation2], 16
  %22 = sfence
  $region1: #{tpu_custom_call.1} parent=0
    #allocation4 [shape = 'u8[8192]{0}', space=vmem, size = 0x2000, scoped, tag = 'output window, operand 0']
    #allocation5 [shape = 's32[2]{0}', space=sflag, size = 0x8, scoped, tag = 'scoped memory for tpu_custom_call.1']
    %23 = vsyncpa [#allocation5], 0
    %s24 = scalar_lea.sflag [#allocation5], 1
    %25 = vsyncpa %s24, 0
    loop: start=0, step=1, limit=4
    $region2: #{tpu_custom_call.1} parent=1 // loop_pre_header
      _
    $region3: #{tpu_custom_call.1} parent=1 // loop_header
      %s27 = sphi 0, %s31
      %p28 = scmp.ge.s32.totalorder %s27, 4
      %s34 = sphi 0, %s46
      %s35 = sphi 0, %s42
      %s36 = sphi 0, %s34
      %s37 = sphi 0, %s35
      %s38 = sphi 0, %s36
      %s39 = sphi 0, %s37
      %s51 = sphi 0, %s53
      %s54 = sphi 0, %s51
      %s55 = sphi 0, %s54
      %s71 = sphi 0, %s55
      %s79 = sphi 0, %s81
      %s82 = sphi 0, %s79
      %s83 = sphi 0, %s82
      %s99 = sphi 0, %s83
      %s103 = sphi 0, %s103
      %s105 = sphi 0, %s103
      %s106 = sphi 0, %s105
      %s120 = sphi 0, %s106
      %s124 = sphi 0, %s124
      %s126 = sphi 0, %s124
      %s127 = sphi 0, %s126
      %s141 = sphi 0, %s127
      %s145 = sphi 0, %s145
      %s147 = sphi 0, %s145
      %s148 = sphi 0, %s147
      %s162 = sphi 0, %s148
      %s166 = sphi 0, %s166
      %s168 = sphi 0, %s166
      %s169 = sphi 0, %s168
      %s183 = sphi 0, %s169
      %s187 = sphi 0, %s187
      %s189 = sphi 0, %s187
      %s190 = sphi 0, %s189
      %s204 = sphi 0, %s190
      %s208 = sphi 0, %s208
      %s210 = sphi 0, %s208
      %s211 = sphi 0, %s210
      %s225 = sphi 0, %s211
      %s229 = sphi 0, %s229
      %s231 = sphi 0, %s229
      %s232 = sphi 0, %s231
      %s246 = sphi 0, %s232
      %s254 = sphi 0, %s256
      %s257 = sphi 0, %s254
      %s258 = sphi 0, %s257
      %s274 = sphi 0, %s258
    $region4: #{tpu_custom_call.1} parent=1 // loop_header_branch
      %30 = sbr.rel (%p28) target = $region8
    $region5: #{tpu_custom_call.1} parent=1 // loop_body
      %s32 = ssub.s32 %s27, 1
      %s33 = ssub.s32 %s27, 2
      %s40 = sadd.s32 1, %s35
      %p41 = scmp.ge.s32.totalorder %s40, 1
      %s42 = scalar_select %p41, 0, %s40
      %s43 = sadd.s32 1, %s34
      %s44 = scalar_select %p41, %s43, %s34
      %p45 = scmp.ge.s32.totalorder %s44, 2
      %s46 = scalar_select %p45, 0, %s44
      %s47 = ssub.s32 %s34, %s46
      %s48 = ssub.s32 %s35, %s42
      %s49 = sor.u32 %s47, %s48
      %p50 = scmp.eq.s32.totalorder %s49, 0
      %s52 = sadd.s32 %s51, 1
      %s53 = scalar_select %p50, %s51, %s52
      %p56 = pneg %p50
      %p57 = scmp.eq.s32.totalorder %s27, 1
      %p58 = por %p56, %p57
      %p59 = scmp.ne.s32.totalorder %s51, %s54
      %p60 = scmp.eq.s32.totalorder %s27, 0
      %p61 = por %p59, %p60
      %p62 = scmp.ne.s32.totalorder %s51, %s54
      %p63 = scmp.eq.s32.totalorder %s32, 1
      %p64 = por %p62, %p63
      %p65 = scmp.ne.s32.totalorder %s54, %s55
      %p66 = scmp.eq.s32.totalorder %s32, 0
      %p67 = por %p65, %p66
      %p68 = scmp.ne.s32.totalorder %s54, %s55
      %p69 = scmp.eq.s32.totalorder %s33, 1
      %p70 = por %p68, %p69
      %p72 = scmp.ne.s32.totalorder %s55, %s71
      %p73 = scmp.eq.s32.totalorder %s33, 0
      %p74 = por %p72, %p73
      %s75 = ssub.s32 %s34, %s46
      %s76 = ssub.s32 %s35, %s42
      %s77 = sor.u32 %s75, %s76
      %p78 = scmp.eq.s32.totalorder %s77, 0
      %s80 = sadd.s32 %s79, 1
      %s81 = scalar_select %p78, %s79, %s80
      %p84 = pneg %p78
      %p85 = scmp.eq.s32.totalorder %s27, 1
      %p86 = por %p84, %p85
      %p87 = scmp.ne.s32.totalorder %s79, %s82
      %p88 = scmp.eq.s32.totalorder %s27, 0
      %p89 = por %p87, %p88
      %p90 = scmp.ne.s32.totalorder %s79, %s82
      %p91 = scmp.eq.s32.totalorder %s32, 1
      %p92 = por %p90, %p91
      %p93 = scmp.ne.s32.totalorder %s82, %s83
      %p94 = scmp.eq.s32.totalorder %s32, 0
      %p95 = por %p93, %p94
      %p96 = scmp.ne.s32.totalorder %s82, %s83
      %p97 = scmp.eq.s32.totalorder %s33, 1
      %p98 = por %p96, %p97
      %p100 = scmp.ne.s32.totalorder %s83, %s99
      %p101 = scmp.eq.s32.totalorder %s33, 0
      %p102 = por %p100, %p101
      %s104 = sadd.s32 %s103, 1
      %p107 = scmp.eq.s32.totalorder %s27, 1
      %p108 = scmp.ne.s32.totalorder %s103, %s105
      %p109 = scmp.eq.s32.totalorder %s27, 0
      %p110 = por %p108, %p109
      %p111 = scmp.ne.s32.totalorder %s103, %s105
      %p112 = scmp.eq.s32.totalorder %s32, 1
      %p113 = por %p111, %p112
      %p114 = scmp.ne.s32.totalorder %s105, %s106
      %p115 = scmp.eq.s32.totalorder %s32, 0
      %p116 = por %p114, %p115
      %p117 = scmp.ne.s32.totalorder %s105, %s106
      %p118 = scmp.eq.s32.totalorder %s33, 1
      %p119 = por %p117, %p118
      %p121 = scmp.ne.s32.totalorder %s106, %s120
      %p122 = scmp.eq.s32.totalorder %s33, 0
      %p123 = por %p121, %p122
      %s125 = sadd.s32 %s124, 1
      %p128 = scmp.eq.s32.totalorder %s27, 1
      %p129 = scmp.ne.s32.totalorder %s124, %s126
      %p130 = scmp.eq.s32.totalorder %s27, 0
      %p131 = por %p129, %p130
      %p132 = scmp.ne.s32.totalorder %s124, %s126
      %p133 = scmp.eq.s32.totalorder %s32, 1
      %p134 = por %p132, %p133
      %p135 = scmp.ne.s32.totalorder %s126, %s127
      %p136 = scmp.eq.s32.totalorder %s32, 0
      %p137 = por %p135, %p136
      %p138 = scmp.ne.s32.totalorder %s126, %s127
      %p139 = scmp.eq.s32.totalorder %s33, 1
      %p140 = por %p138, %p139
      %p142 = scmp.ne.s32.totalorder %s127, %s141
      %p143 = scmp.eq.s32.totalorder %s33, 0
      %p144 = por %p142, %p143
      %s146 = sadd.s32 %s145, 1
      %p149 = scmp.eq.s32.totalorder %s27, 1
      %p150 = scmp.ne.s32.totalorder %s145, %s147
      %p151 = scmp.eq.s32.totalorder %s27, 0
      %p152 = por %p150, %p151
      %p153 = scmp.ne.s32.totalorder %s145, %s147
      %p154 = scmp.eq.s32.totalorder %s32, 1
      %p155 = por %p153, %p154
      %p156 = scmp.ne.s32.totalorder %s147, %s148
      %p157 = scmp.eq.s32.totalorder %s32, 0
      %p158 = por %p156, %p157
      %p159 = scmp.ne.s32.totalorder %s147, %s148
      %p160 = scmp.eq.s32.totalorder %s33, 1
      %p161 = por %p159, %p160
      %p163 = scmp.ne.s32.totalorder %s148, %s162
      %p164 = scmp.eq.s32.totalorder %s33, 0
      %p165 = por %p163, %p164
      %s167 = sadd.s32 %s166, 1
      %p170 = scmp.eq.s32.totalorder %s27, 1
      %p171 = scmp.ne.s32.totalorder %s166, %s168
      %p172 = scmp.eq.s32.totalorder %s27, 0
      %p173 = por %p171, %p172
      %p174 = scmp.ne.s32.totalorder %s166, %s168
      %p175 = scmp.eq.s32.totalorder %s32, 1
      %p176 = por %p174, %p175
      %p177 = scmp.ne.s32.totalorder %s168, %s169
      %p178 = scmp.eq.s32.totalorder %s32, 0
      %p179 = por %p177, %p178
      %p180 = scmp.ne.s32.totalorder %s168, %s169
      %p181 = scmp.eq.s32.totalorder %s33, 1
      %p182 = por %p180, %p181
      %p184 = scmp.ne.s32.totalorder %s169, %s183
      %p185 = scmp.eq.s32.totalorder %s33, 0
      %p186 = por %p184, %p185
      %s188 = sadd.s32 %s187, 1
      %p191 = scmp.eq.s32.totalorder %s27, 1
      %p192 = scmp.ne.s32.totalorder %s187, %s189
      %p193 = scmp.eq.s32.totalorder %s27, 0
      %p194 = por %p192, %p193
      %p195 = scmp.ne.s32.totalorder %s187, %s189
      %p196 = scmp.eq.s32.totalorder %s32, 1
      %p197 = por %p195, %p196
      %p198 = scmp.ne.s32.totalorder %s189, %s190
      %p199 = scmp.eq.s32.totalorder %s32, 0
      %p200 = por %p198, %p199
      %p201 = scmp.ne.s32.totalorder %s189, %s190
      %p202 = scmp.eq.s32.totalorder %s33, 1
      %p203 = por %p201, %p202
      %p205 = scmp.ne.s32.totalorder %s190, %s204
      %p206 = scmp.eq.s32.totalorder %s33, 0
      %p207 = por %p205, %p206
      %s209 = sadd.s32 %s208, 1
      %p212 = scmp.eq.s32.totalorder %s27, 1
      %p213 = scmp.ne.s32.totalorder %s208, %s210
      %p214 = scmp.eq.s32.totalorder %s27, 0
      %p215 = por %p213, %p214
      %p216 = scmp.ne.s32.totalorder %s208, %s210
      %p217 = scmp.eq.s32.totalorder %s32, 1
      %p218 = por %p216, %p217
      %p219 = scmp.ne.s32.totalorder %s210, %s211
      %p220 = scmp.eq.s32.totalorder %s32, 0
      %p221 = por %p219, %p220
      %p222 = scmp.ne.s32.totalorder %s210, %s211
      %p223 = scmp.eq.s32.totalorder %s33, 1
      %p224 = por %p222, %p223
      %p226 = scmp.ne.s32.totalorder %s211, %s225
      %p227 = scmp.eq.s32.totalorder %s33, 0
      %p228 = por %p226, %p227
      %s230 = sadd.s32 %s229, 1
      %p233 = scmp.eq.s32.totalorder %s27, 1
      %p234 = scmp.ne.s32.totalorder %s229, %s231
      %p235 = scmp.eq.s32.totalorder %s27, 0
      %p236 = por %p234, %p235
      %p237 = scmp.ne.s32.totalorder %s229, %s231
      %p238 = scmp.eq.s32.totalorder %s32, 1
      %p239 = por %p237, %p238
      %p240 = scmp.ne.s32.totalorder %s231, %s232
      %p241 = scmp.eq.s32.totalorder %s32, 0
      %p242 = por %p240, %p241
      %p243 = scmp.ne.s32.totalorder %s231, %s232
      %p244 = scmp.eq.s32.totalorder %s33, 1
      %p245 = por %p243, %p244
      %p247 = scmp.ne.s32.totalorder %s232, %s246
      %p248 = scmp.eq.s32.totalorder %s33, 0
      %p249 = por %p247, %p248
      %s250 = ssub.s32 %s34, %s46
      %s251 = ssub.s32 %s35, %s42
      %s252 = sor.u32 %s250, %s251
      %p253 = scmp.eq.s32.totalorder %s252, 0
      %s255 = sadd.s32 %s254, 1
      %s256 = scalar_select %p253, %s254, %s255
      %p259 = pneg %p253
      %p260 = scmp.eq.s32.totalorder %s27, 1
      %p261 = por %p259, %p260
      %p262 = scmp.ne.s32.totalorder %s254, %s257
      %p263 = scmp.eq.s32.totalorder %s27, 0
      %p264 = por %p262, %p263
      %p265 = scmp.ne.s32.totalorder %s254, %s257
      %p266 = scmp.eq.s32.totalorder %s32, 1
      %p267 = por %p265, %p266
      %p268 = scmp.ne.s32.totalorder %s257, %s258
      %p269 = scmp.eq.s32.totalorder %s32, 0
      %p270 = por %p268, %p269
      %p271 = scmp.ne.s32.totalorder %s257, %s258
      %p272 = scmp.eq.s32.totalorder %s33, 1
      %p273 = por %p271, %p272
      %p275 = scmp.ne.s32.totalorder %s258, %s274
      %p276 = scmp.eq.s32.totalorder %s33, 0
      %p277 = por %p275, %p276
      %p278 = scmp.le.s32.totalorder 1, %s27
      %p279 = scmp.lt.s32.totalorder %s27, 3
      %p280 = pnand %p278, %p279
      %p281 = pneg %p280
      // Predicated region
      $region9: #{tpu_custom_call.1} parent=5 // pred_check
        _
      $region10: #{tpu_custom_call.1} parent=5 // pred_check_branch
        %283 = sbr.rel (%p280) target = $region12
      $region11: #{tpu_custom_call.1} parent=5 // pred_region
        %s284 = ssub.s32 %s27, 1
        // Predicated region
        $region13: #{tpu_custom_call.1} parent=11 // pred_check
          %p285 = pneg %p116
        $region14: #{tpu_custom_call.1} parent=11 // pred_check_branch
          %287 = sbr.rel (%p285) target = $region16
        $region15: #{tpu_custom_call.1} parent=11 // pred_region
          _
        $region16: #{tpu_custom_call.1} parent=11 // pred_fallthru
          _
        // Predicated region
        $region17: #{tpu_custom_call.1} parent=11 // pred_check
          %p288 = pneg %p137
        $region18: #{tpu_custom_call.1} parent=11 // pred_check_branch
          %290 = sbr.rel (%p288) target = $region20
        $region19: #{tpu_custom_call.1} parent=11 // pred_region
          _
        $region20: #{tpu_custom_call.1} parent=11 // pred_fallthru
          _
        // Predicated region
        $region21: #{tpu_custom_call.1} parent=11 // pred_check
          %p291 = pneg %p158
        $region22: #{tpu_custom_call.1} parent=11 // pred_check_branch
          %293 = sbr.rel (%p291) target = $region24
        $region23: #{tpu_custom_call.1} parent=11 // pred_region
          _
        $region24: #{tpu_custom_call.1} parent=11 // pred_fallthru
          _
        // Predicated region
        $region25: #{tpu_custom_call.1} parent=11 // pred_check
          %p294 = pneg %p179
        $region26: #{tpu_custom_call.1} parent=11 // pred_check_branch
          %296 = sbr.rel (%p294) target = $region28
        $region27: #{tpu_custom_call.1} parent=11 // pred_region
          _
        $region28: #{tpu_custom_call.1} parent=11 // pred_fallthru
          _
        // Predicated region
        $region29: #{tpu_custom_call.1} parent=11 // pred_check
          %p297 = pneg %p200
        $region30: #{tpu_custom_call.1} parent=11 // pred_check_branch
          %299 = sbr.rel (%p297) target = $region32
        $region31: #{tpu_custom_call.1} parent=11 // pred_region
          _
        $region32: #{tpu_custom_call.1} parent=11 // pred_fallthru
          _
        // Predicated region
        $region33: #{tpu_custom_call.1} parent=11 // pred_check
          %p300 = pneg %p221
        $region34: #{tpu_custom_call.1} parent=11 // pred_check_branch
          %302 = sbr.rel (%p300) target = $region36
        $region35: #{tpu_custom_call.1} parent=11 // pred_region
          _
        $region36: #{tpu_custom_call.1} parent=11 // pred_fallthru
          _
        // Predicated region
        $region37: #{tpu_custom_call.1} parent=11 // pred_check
          %p303 = pneg %p242
        $region38: #{tpu_custom_call.1} parent=11 // pred_check_branch
          %305 = sbr.rel (%p303) target = $region40
        $region39: #{tpu_custom_call.1} parent=11 // pred_region
          _
        $region40: #{tpu_custom_call.1} parent=11 // pred_fallthru
          _
      $region12: #{tpu_custom_call.1} parent=5 // pred_fallthru
        _
      %p306 = scmp.lt.s32.totalorder %s27, 2
      // Predicated region
      $region41: #{tpu_custom_call.1} parent=5 // pred_check
        %p307 = pneg %p306
      $region42: #{tpu_custom_call.1} parent=5 // pred_check_branch
        %309 = sbr.rel (%p307) target = $region44
      $region43: #{tpu_custom_call.1} parent=5 // pred_region
        // Predicated region
        $region45: #{tpu_custom_call.1} parent=43 // pred_check
          %p310 = pneg %p61
        $region46: #{tpu_custom_call.1} parent=43 // pred_check_branch
          %312 = sbr.rel (%p310) target = $region48
        $region47: #{tpu_custom_call.1} parent=43 // pred_region
          %s313 = smul.u32 2, %s35
          %p314 = scmp.lt.s32.totalorder %s34, 1
          %s315 = scalar_select %p314, %s34, 1
          %p316 = scmp.lt.s32.totalorder %s313, 1
          %s317 = scalar_select %p316, %s313, 1
          %s318 = smul.addr %s315, 10
          %s319 = sadd.s32 %s317, %s318
          %s320 = smul.addr %s319, 4
          %s321 = scalar_lea.vmem %s1, %s320
          %s322 = smul.u32 2, %s35
        $region48: #{tpu_custom_call.1} parent=43 // pred_fallthru
          _
        // Predicated region
        $region49: #{tpu_custom_call.1} parent=43 // pred_check
          %p323 = pneg %p89
        $region50: #{tpu_custom_call.1} parent=43 // pred_check_branch
          %325 = sbr.rel (%p323) target = $region52
        $region51: #{tpu_custom_call.1} parent=43 // pred_region
          %s326 = smul.u32 2, %s35
          %p327 = scmp.lt.s32.totalorder %s34, 1
          %s328 = scalar_select %p327, %s34, 1
          %p329 = scmp.lt.s32.totalorder %s326, 1
          %s330 = scalar_select %p329, %s326, 1
          %s331 = smul.addr %s328, 2
          %s332 = sadd.s32 %s330, %s331
          %s333 = smul.addr %s332, 4
          %s334 = scalar_lea.vmem %s2, %s333
          %s335 = smul.u32 2, %s35
        $region52: #{tpu_custom_call.1} parent=43 // pred_fallthru
          _
      $region44: #{tpu_custom_call.1} parent=5 // pred_fallthru
        _
      %p336 = scmp.le.s32.totalorder 1, %s27
      %p337 = scmp.lt.s32.totalorder %s27, 3
      %p338 = pnand %p336, %p337
      %p339 = pneg %p338
      // Predicated region
      $region53: #{tpu_custom_call.1} parent=5 // pred_check
        _
      $region54: #{tpu_custom_call.1} parent=5 // pred_check_branch
        %341 = sbr.rel (%p338) target = $region56
      $region55: #{tpu_custom_call.1} parent=5 // pred_region
        %s342 = ssub.s32 %s27, 1
        %s343 = smul.u32 2, %s37
        %p344 = scmp.lt.s32.totalorder %s36, 1
        %s345 = scalar_select %p344, %s36, 1
        %p346 = scmp.lt.s32.totalorder %s343, 1
        %s347 = scalar_select %p346, %s343, 1
        %s348 = smul.addr %s345, 10
        %s349 = sadd.s32 %s347, %s348
        %s350 = smul.addr %s349, 4
        %s351 = scalar_lea.vmem %s1, %s350
        %p352 = pneg %p67
        %p353 = pneg %p64
        %s354 = smul.u32 2, %s37
        %p355 = scmp.lt.s32.totalorder %s36, 1
        %s356 = scalar_select %p355, %s36, 1
        %p357 = scmp.lt.s32.totalorder %s354, 1
        %s358 = scalar_select %p357, %s354, 1
        %s359 = smul.addr %s356, 2
        %s360 = sadd.s32 %s358, %s359
        %s361 = smul.addr %s360, 4
        %s362 = scalar_lea.vmem %s2, %s361
        %p363 = pneg %p95
        %p364 = pneg %p92
        %p365 = pneg %p116
        %p366 = pneg %p113
        %p367 = pneg %p137
        %p368 = pneg %p134
        %p369 = pneg %p158
        %p370 = pneg %p155
        %p371 = pneg %p179
        %p372 = pneg %p176
        %p373 = pneg %p200
        %p374 = pneg %p197
        %p375 = pneg %p221
        %p376 = pneg %p218
        %p377 = pneg %p242
        %p378 = pneg %p239
        %p379 = pneg %p270
        %p380 = pneg %p267
        %s381 = sand.u32 %s257, 1
        %s382 = scalar_lea.sflag [#allocation5], %s381
        %s383 = sand.u32 %s257, 1
        %s384 = smul.addr %s383, 8
        %s385 = scalar_lea.vmem [#allocation4], %s384
        %s386 = smul.u32 2, %s37
        %p387 = scmp.lt.s32.totalorder %s36, 1
        %s388 = scalar_select %p387, %s36, 1
        %p389 = scmp.lt.s32.totalorder %s386, 1
        %s390 = scalar_select %p389, %s386, 1
        %s391 = smul.addr %s388, 10
        %s392 = sadd.s32 %s390, %s391
        %s393 = smul.addr %s392, 4
        %s394 = scalar_lea.vmem %s1, %s393
        %s395 = smul.u32 2, %s37
        %s396 = smul.u32 2, %s37
        %p397 = scmp.lt.s32.totalorder %s36, 1
        %s398 = scalar_select %p397, %s36, 1
        %p399 = scmp.lt.s32.totalorder %s396, 1
        %s400 = scalar_select %p399, %s396, 1
        %s401 = smul.addr %s398, 2
        %s402 = sadd.s32 %s400, %s401
        %s403 = smul.addr %s402, 4
        %s404 = scalar_lea.vmem %s2, %s403
        %s405 = smul.u32 2, %s37
        %s406 = smul.u32 2, %s37
        %s408 = sld [smem:[#allocation3 + %s36]]
        %v409 = vstv %s408
        %v410 = vmul.f32 %v409, %v409
        %v411 = vadd.f32 %v410, 1.0
        %v412 = vrsqrt.pop %v411
        %v413 = vmul.f32 %v412, %v411
        %v414 = vmul.f32 %v413, %v412
        %v415 = vmul.f32 0.5, %v414
        %v416 = vsub.f32 1.5, %v415
        %v417 = vmul.f32 %v412, %v416
        %vm418 = vweird.f32 %v411
        %vm419 = vweird.f32 %v412
        %vm420 = vmor %vm418, %vm419
        %v421 = vsel %vm420, %v412, %v417
        %v422 = vld [vmem:[%s3] sm:$0xff]
        %v423 = vsub.f32 %v409, %v422
        %v424 = vand.u32 2147483647, %v423
        %425 = vmin.xlane.f32.xlu0 %v424
        %v426 = vpop.xlane.xlu0 %425
        %v427 = vrot.slane %v426, 4
        %v428 = vmin.f32 %v426, %v427
        %v429 = vrot.slane %v428, 2
        %v430 = vmin.f32 %v428, %v429
        %v431 = vrot.slane %v430, 1
        %v432 = vmin.f32 %v430, %v431
        %v433 = vlaneseq
        %v434 = vshrl.u32 %v433, 7
        %v435 = vlaneseq
        %v436 = vand.u32 %v435, 127
        %v437 = vmul.u32 %v434, 128
        %v438 = vadd.s32 %v437, %v436
        %vm439 = vcmp.le.f32.partialorder %v424, %v432
        %v440 = vsel %vm439, %v438, 1073741824
        %v441 = vand.u32 %v440, 65535
        %v442 = vshra.s32 %v440, 16
        %v443 = vcvt.s32.f32 %v441
        %v444 = vcvt.s32.f32 %v442
        %445 = vmin.xlane.f32.xlu0 %v444
        %v446 = vpop.xlane.xlu0 %445
        %vm447 = vcmp.eq.f32.partialorder %v444, %v446
        %v448 = vsel %vm447, %v443, inf
        %449 = vmin.xlane.f32.xlu0 %v448
        %v450 = vpop.xlane.xlu0 %449
        %v451 = vcvt.f32.s32 %v450
        %v452 = vcvt.f32.s32 %v446
        %v453 = vshll.u32 %v452, 16
        %v454 = vadd.s32 %v453, %v451
        %v455 = vrot.slane %v454, 4
        %vm456 = vcmp.lt.s32.totalorder %v454, %v455
        %v457 = vsel %vm456, %v454, %v455
        %v458 = vrot.slane %v457, 2
        %vm459 = vcmp.lt.s32.totalorder %v457, %v458
        %v460 = vsel %vm459, %v457, %v458
        %v461 = vrot.slane %v460, 1
        %vm462 = vcmp.lt.s32.totalorder %v460, %v461
        %v463 = vsel %vm462, %v460, %v461
        %v464 = vcvt.s32.f32 %v463
        %v465 = vsub.f32 999.0, %v464
        %v466 = vsub.f32 0.0, %v465
        %v467 = vld [vmem:[%s4] sm:$0x1]
        %v468 = vmul.f32 %v466, %v467
        %v469 = vmul.f32 %v468, 1.442695
        %v470 = vpow.pop %v469
        %v471 = vld [vmem:[%s6] sm:$0xff]
        %v472 = vld [vmem:[%s6 + $0x8] sm:$0xff]
        %v473 = vld [vmem:[%s6 + $0x10] sm:$0xff]
        %v474 = vld [vmem:[%s6 + $0x18] sm:$0xff]
        %v476 = vperm.slane %v470, 0
        %v478 = vmul.f32 %v471, %v476
        %v479 = vmul.f32 %v472, %v476
        %v480 = vmul.f32 %v473, %v476
        %v481 = vmul.f32 %v474, %v476
        %vm482 = vcmask 130048
        %v483 = vsel %vm482, %v478, 0.0
        %484 = vadd.xlane.f32.xlu0 %v483
        %v485 = vpop.xlane.xlu0 %484
        %v486 = vsel %vm482, %v479, 0.0
        %487 = vadd.xlane.f32.xlu0 %v486
        %v488 = vpop.xlane.xlu0 %487
        %v489 = vsel %vm482, %v480, 0.0
        %490 = vadd.xlane.f32.xlu0 %v489
        %v491 = vpop.xlane.xlu0 %490
        %v492 = vsel %vm482, %v481, 0.0
        %493 = vadd.xlane.f32.xlu0 %v492
        %v494 = vpop.xlane.xlu0 %493
        %v495 = vld [vmem:[%s7] sm:$0xff]
        %v496 = vld [vmem:[%s7 + $0x8] sm:$0xff]
        %v497 = vld [vmem:[%s7 + $0x10] sm:$0xff]
        %v498 = vld [vmem:[%s7 + $0x18] sm:$0xff]
        %v499 = vadd.f32 %v495, %v485
        %v500 = vadd.f32 %v496, %v488
        %v501 = vadd.f32 %v497, %v491
        %v502 = vadd.f32 %v498, %v494
        %v503 = vld [vmem:[%s5] sm:$0xf]
        %v504 = vld [vmem:[%s5 + $0x4] sm:$0xf]
        %v505 = vld [vmem:[%s5 + $0x8] sm:$0xf]
        %v506 = vld [vmem:[%s5 + $0xc] sm:$0xf]
        %v507 = vld [vmem:[%s394] sm:$0xff]
        %v508 = vld [vmem:[%s394 + $0x8] sm:$0xff]
        %v509 = vld [vmem:[%s394 + $0x10] sm:$0xff]
        %v510 = vld [vmem:[%s394 + $0x18] sm:$0xff]
        %v511 = vld [vmem:[%s394 + $0x20] sm:$0x33]
        %v516 = vunpack.c.l.b16 %v503
        %v517 = vunpack.c.l.b16 %v504
        %v518 = vunpack.c.l.b16 %v505
        %v519 = vunpack.c.l.b16 %v506
        %v520 = vpack.c.b16 %v517, %v516
        %v521 = vpack.c.b16 %v519, %v518
        %v527 = vunpack.c.l.b16 %v507
        %v528 = vunpack.c.h.b16 %v507
        %v529 = vunpack.c.l.b16 %v508
        %v530 = vunpack.c.h.b16 %v508
        %v531 = vunpack.c.l.b16 %v509
        %v532 = vunpack.c.h.b16 %v509
        %v533 = vunpack.c.l.b16 %v510
        %v534 = vunpack.c.h.b16 %v510
        %v535 = vunpack.c.l.b16 %v511
        %v536 = vunpack.c.h.b16 %v511
        %v537 = vpack.c.b16 %v529, %v527
        %v538 = vpack.c.b16 %v530, %v528
        %v539 = vpack.c.b16 %v533, %v531
        %v540 = vpack.c.b16 %v534, %v532
        %v541 = vpack.c.b16 %v535, %v535
        %v542 = vpack.c.b16 %v536, %v536
        %vm547 = vcmask 293888
        %v549 = vsel %vm547, %v520, 0
        %v552 = vsel %vm547, %v521, 0
        %vm554 = vcmask 1041408
        %v556 = vsel %vm554, %v541, 0
        %v559 = vsel %vm554, %v542, 0
        %561 = vmatpush.bf16.msra.mxu0 0
        %562 = vmatpush.bf16.msra.mxu0 0
        %563 = vmatpush.bf16.msra.mxu0 0
        %564 = vmatpush.bf16.msra.mxu0 0
        %565 = vmatpush.bf16.msra.mxu0 0
        %566 = vmatpush.bf16.msra.mxu0 %v556
        %567 = vmatpush.bf16.msra.mxu0 %v539
        %568 = vmatpush.bf16.msra.mxu0 %v537
        %569 = vmatmul.bf16.gmra.mxu0 %v549
        %v570 = vpop.f32.mrf.mxu0
        %v571 = vadd.f32 0.0, %v570
        %v572 = vpop.f32.mrf.mxu0
        %v573 = vadd.f32 0.0, %v572
        %574 = vmatmul.bf16.gmra.mxu0 %v552
        %v575 = vpop.f32.mrf.mxu0
        %v576 = vadd.f32 0.0, %v575
        %v577 = vpop.f32.mrf.mxu0
        %v578 = vadd.f32 0.0, %v577
        %579 = vdwg.mxu0
        %580 = vmatpush.bf16.msra.mxu0 0
        %581 = vmatpush.bf16.msra.mxu0 0
        %582 = vmatpush.bf16.msra.mxu0 0
        %583 = vmatpush.bf16.msra.mxu0 0
        %584 = vmatpush.bf16.msra.mxu0 0
        %585 = vmatpush.bf16.msra.mxu0 %v559
        %586 = vmatpush.bf16.msra.mxu0 %v540
        %587 = vmatpush.bf16.msra.mxu0 %v538
        %588 = vmatmul.bf16.gmra.mxu0 %v549
        %v589 = vpop.f32.mrf.mxu0
        %v590 = vadd.f32 0.0, %v589
        %v591 = vpop.f32.mrf.mxu0
        %v592 = vadd.f32 0.0, %v591
        %593 = vmatmul.bf16.gmra.mxu0 %v552
        %v594 = vpop.f32.mrf.mxu0
        %v595 = vadd.f32 0.0, %v594
        %v596 = vpop.f32.mrf.mxu0
        %v597 = vadd.f32 0.0, %v596
        %598 = vdwg.mxu0
        %v599 = vmul.f32 %v421, %v571
        %v600 = vmul.f32 %v421, %v590
        %v601 = vmul.f32 %v421, %v573
        %v602 = vmul.f32 %v421, %v592
        %v603 = vmul.f32 %v421, %v576
        %v604 = vmul.f32 %v421, %v595
        %v605 = vmul.f32 %v421, %v578
        %v606 = vmul.f32 %v421, %v597
        %608 = vset.pattern.permute.xlu0 0
        %609 = vperm.xlu0 %608, %v499
        %v610 = vpop.permute.xlu0 %609
        %613 = vset.pattern.permute.xlu0 0
        %614 = vperm.xlu0 %613, %v500
        %v615 = vpop.permute.xlu0 %614
        %618 = vset.pattern.permute.xlu0 0
        %619 = vperm.xlu0 %618, %v501
        %v620 = vpop.permute.xlu0 %619
        %623 = vset.pattern.permute.xlu0 0
        %624 = vperm.xlu0 %623, %v502
        %v625 = vpop.permute.xlu0 %624
        %v627 = vadd.f32 %v599, %v610
        %v628 = vadd.f32 %v600, %v610
        %v629 = vadd.f32 %v601, %v615
        %v630 = vadd.f32 %v602, %v615
        %v631 = vadd.f32 %v603, %v620
        %v632 = vadd.f32 %v604, %v620
        %v633 = vadd.f32 %v605, %v625
        %v634 = vadd.f32 %v606, %v625
        %v635 = vxor.u32 %v627, 2147483648
        %v636 = vxor.u32 %v628, 2147483648
        %v637 = vxor.u32 %v629, 2147483648
        %v638 = vxor.u32 %v630, 2147483648
        %v639 = vxor.u32 %v631, 2147483648
        %v640 = vxor.u32 %v632, 2147483648
        %v641 = vxor.u32 %v633, 2147483648
        %v642 = vxor.u32 %v634, 2147483648
        %v643 = vmul.f32 %v635, 1.442695
        %v644 = vpow.pop %v643
        %v645 = vmul.f32 %v636, 1.442695
        %v646 = vpow.pop %v645
        %v647 = vmul.f32 %v637, 1.442695
        %v648 = vpow.pop %v647
        %v649 = vmul.f32 %v638, 1.442695
        %v650 = vpow.pop %v649
        %v651 = vmul.f32 %v639, 1.442695
        %v652 = vpow.pop %v651
        %v653 = vmul.f32 %v640, 1.442695
        %v654 = vpow.pop %v653
        %v655 = vmul.f32 %v641, 1.442695
        %v656 = vpow.pop %v655
        %v657 = vmul.f32 %v642, 1.442695
        %v658 = vpow.pop %v657
        %v659 = vadd.f32 %v644, 1.0
        %v660 = vadd.f32 %v646, 1.0
        %v661 = vadd.f32 %v648, 1.0
        %v662 = vadd.f32 %v650, 1.0
        %v663 = vadd.f32 %v652, 1.0
        %v664 = vadd.f32 %v654, 1.0
        %v665 = vadd.f32 %v656, 1.0
        %v666 = vadd.f32 %v658, 1.0
        %v667 = vrcp.pop %v659
        %v668 = vmul.f32 %v659, %v667
        %v669 = vsub.f32 1.0, %v668
        %v670 = vmul.f32 %v667, %v669
        %v671 = vadd.f32 %v667, %v670
        %vm672 = vweird.f32 %v659
        %vm673 = vweird.f32 %v667
        %vm674 = vmor %vm672, %vm673
        %v675 = vsel %vm674, %v667, %v671
        %v676 = vand.u32 2147483647, %v659
        %vm677 = vcmp.eq.f32.partialorder %v676, 8.507059e+37
        %v678 = vand.u32 %v659, 2147483648
        %v679 = vor.u32 1.1754944e-38, %v678
        %v680 = vsel %vm677, %v679, %v675
        %v681 = vmul.f32 1.0, %v680
        %v682 = vrcp.pop %v660
        %v683 = vmul.f32 %v660, %v682
        %v684 = vsub.f32 1.0, %v683
        %v685 = vmul.f32 %v682, %v684
        %v686 = vadd.f32 %v682, %v685
        %vm687 = vweird.f32 %v660
        %vm688 = vweird.f32 %v682
        %vm689 = vmor %vm687, %vm688
        %v690 = vsel %vm689, %v682, %v686
        %v691 = vand.u32 2147483647, %v660
        %vm692 = vcmp.eq.f32.partialorder %v691, 8.507059e+37
        %v693 = vand.u32 %v660, 2147483648
        %v694 = vor.u32 1.1754944e-38, %v693
        %v695 = vsel %vm692, %v694, %v690
        %v696 = vmul.f32 1.0, %v695
        %v697 = vrcp.pop %v661
        %v698 = vmul.f32 %v661, %v697
        %v699 = vsub.f32 1.0, %v698
        %v700 = vmul.f32 %v697, %v699
        %v701 = vadd.f32 %v697, %v700
        %vm702 = vweird.f32 %v661
        %vm703 = vweird.f32 %v697
        %vm704 = vmor %vm702, %vm703
        %v705 = vsel %vm704, %v697, %v701
        %v706 = vand.u32 2147483647, %v661
        %vm707 = vcmp.eq.f32.partialorder %v706, 8.507059e+37
        %v708 = vand.u32 %v661, 2147483648
        %v709 = vor.u32 1.1754944e-38, %v708
        %v710 = vsel %vm707, %v709, %v705
        %v711 = vmul.f32 1.0, %v710
        %v712 = vrcp.pop %v662
        %v713 = vmul.f32 %v662, %v712
        %v714 = vsub.f32 1.0, %v713
        %v715 = vmul.f32 %v712, %v714
        %v716 = vadd.f32 %v712, %v715
        %vm717 = vweird.f32 %v662
        %vm718 = vweird.f32 %v712
        %vm719 = vmor %vm717, %vm718
        %v720 = vsel %vm719, %v712, %v716
        %v721 = vand.u32 2147483647, %v662
        %vm722 = vcmp.eq.f32.partialorder %v721, 8.507059e+37
        %v723 = vand.u32 %v662, 2147483648
        %v724 = vor.u32 1.1754944e-38, %v723
        %v725 = vsel %vm722, %v724, %v720
        %v726 = vmul.f32 1.0, %v725
        %v727 = vrcp.pop %v663
        %v728 = vmul.f32 %v663, %v727
        %v729 = vsub.f32 1.0, %v728
        %v730 = vmul.f32 %v727, %v729
        %v731 = vadd.f32 %v727, %v730
        %vm732 = vweird.f32 %v663
        %vm733 = vweird.f32 %v727
        %vm734 = vmor %vm732, %vm733
        %v735 = vsel %vm734, %v727, %v731
        %v736 = vand.u32 2147483647, %v663
        %vm737 = vcmp.eq.f32.partialorder %v736, 8.507059e+37
        %v738 = vand.u32 %v663, 2147483648
        %v739 = vor.u32 1.1754944e-38, %v738
        %v740 = vsel %vm737, %v739, %v735
        %v741 = vmul.f32 1.0, %v740
        %v742 = vrcp.pop %v664
        %v743 = vmul.f32 %v664, %v742
        %v744 = vsub.f32 1.0, %v743
        %v745 = vmul.f32 %v742, %v744
        %v746 = vadd.f32 %v742, %v745
        %vm747 = vweird.f32 %v664
        %vm748 = vweird.f32 %v742
        %vm749 = vmor %vm747, %vm748
        %v750 = vsel %vm749, %v742, %v746
        %v751 = vand.u32 2147483647, %v664
        %vm752 = vcmp.eq.f32.partialorder %v751, 8.507059e+37
        %v753 = vand.u32 %v664, 2147483648
        %v754 = vor.u32 1.1754944e-38, %v753
        %v755 = vsel %vm752, %v754, %v750
        %v756 = vmul.f32 1.0, %v755
        %v757 = vrcp.pop %v665
        %v758 = vmul.f32 %v665, %v757
        %v759 = vsub.f32 1.0, %v758
        %v760 = vmul.f32 %v757, %v759
        %v761 = vadd.f32 %v757, %v760
        %vm762 = vweird.f32 %v665
        %vm763 = vweird.f32 %v757
        %vm764 = vmor %vm762, %vm763
        %v765 = vsel %vm764, %v757, %v761
        %v766 = vand.u32 2147483647, %v665
        %vm767 = vcmp.eq.f32.partialorder %v766, 8.507059e+37
        %v768 = vand.u32 %v665, 2147483648
        %v769 = vor.u32 1.1754944e-38, %v768
        %v770 = vsel %vm767, %v769, %v765
        %v771 = vmul.f32 1.0, %v770
        %v772 = vrcp.pop %v666
        %v773 = vmul.f32 %v666, %v772
        %v774 = vsub.f32 1.0, %v773
        %v775 = vmul.f32 %v772, %v774
        %v776 = vadd.f32 %v772, %v775
        %vm777 = vweird.f32 %v666
        %vm778 = vweird.f32 %v772
        %vm779 = vmor %vm777, %vm778
        %v780 = vsel %vm779, %v772, %v776
        %v781 = vand.u32 2147483647, %v666
        %vm782 = vcmp.eq.f32.partialorder %v781, 8.507059e+37
        %v783 = vand.u32 %v666, 2147483648
        %v784 = vor.u32 1.1754944e-38, %v783
        %v785 = vsel %vm782, %v784, %v780
        %v786 = vmul.f32 1.0, %v785
        %v787 = vmul.f32 %v627, %v681
        %v788 = vmul.f32 %v628, %v696
        %v789 = vmul.f32 %v629, %v711
        %v790 = vmul.f32 %v630, %v726
        %v791 = vmul.f32 %v631, %v741
        %v792 = vmul.f32 %v632, %v756
        %v793 = vmul.f32 %v633, %v771
        %v794 = vmul.f32 %v634, %v786
        %v795 = vld [vmem:[%s8] sm:$0x3]
        %v796 = vpack.c.bf16 %v789, %v787
        %v797 = vpack.c.bf16 %v790, %v788
        %v798 = vpack.c.bf16 %v793, %v791
        %v799 = vpack.c.bf16 %v794, %v792
        %v800 = vld [vmem:[%s9] sm:$0xf]
        %802 = vset.pattern.permute.xlu0 0
        %803 = vperm.xlu0 %802, %v800
        %v804 = vpop.permute.xlu0 %803
        %vm806 = vcmask 261120
        %v808 = vsel %vm806, %v795, 0
        %810 = vmatpush.bf16.msra.mxu0 0
        %811 = vmatpush.bf16.msra.mxu0 0
        %812 = vmatpush.bf16.msra.mxu0 0
        %813 = vmatpush.bf16.msra.mxu0 0
        %814 = vmatpush.bf16.msra.mxu0 0
        %815 = vmatpush.bf16.msra.mxu0 0
        %816 = vmatpush.bf16.msra.mxu0 %v798
        %817 = vmatpush.bf16.msra.mxu0 %v796
        %818 = vmatmul.bf16.gmra.mxu0 %v808
        %v819 = vpop.f32.mrf.mxu0
        %v820 = vadd.f32 %v804, %v819
        %v821 = vpop.f32.mrf.mxu0
        %822 = vdwg.mxu0
        %823 = vmatpush.bf16.msra.mxu0 0
        %824 = vmatpush.bf16.msra.mxu0 0
        %825 = vmatpush.bf16.msra.mxu0 0
        %826 = vmatpush.bf16.msra.mxu0 0
        %827 = vmatpush.bf16.msra.mxu0 0
        %828 = vmatpush.bf16.msra.mxu0 0
        %829 = vmatpush.bf16.msra.mxu0 %v799
        %830 = vmatpush.bf16.msra.mxu0 %v797
        %831 = vmatmul.bf16.gmra.mxu0 %v808
        %v832 = vpop.f32.mrf.mxu0
        %v833 = vadd.f32 %v804, %v832
        %v834 = vpop.f32.mrf.mxu0
        %835 = vdwg.mxu0
        %v836 = vld [vmem:[%s404] sm:$0xff]
        %v837 = vmul.f32 %v409, %v820
        %v838 = vmul.f32 %v409, %v833
        %v841 = vrot.slane %v838, 4
        %vm842 = vcmask 1043456
        %v843 = vsel %vm842, %v837, %v841
        %v845 = vsub.f32 %v836, %v843
        %846 = vst [vmem:[%s385] sm:$0xff] %v845
        %s847 = sand.u32 %s257, 1
        %s848 = scalar_lea.sflag [#allocation5], %s847
        %s849 = sand.u32 %s257, 1
        %s850 = smul.addr %s849, 8
        %s851 = scalar_lea.vmem [#allocation4], %s850
        // Predicated region
        $region57: #{tpu_custom_call.1} parent=55 // pred_check
          %p852 = pneg %p267
        $region58: #{tpu_custom_call.1} parent=55 // pred_check_branch
          %854 = sbr.rel (%p852) target = $region60
        $region59: #{tpu_custom_call.1} parent=55 // pred_region
          %s855 = smul.u32 2, %s37
          %857 = vsyncadd %s848, 0
          %s858 = smul.addr %s36, 2
          %s859 = sadd.s32 %s855, %s858
          %s860 = smul.addr %s859, 4
          %s861 = scalar_lea.hbm %s10, %s860
          %s863 = sshll.u32 %s851, 4
          %s864 = int_to_ptr.vmem [resolvable:$true] %s863
          %s865 = sshll.u32 %s861, 4
          %s866 = int_to_ptr.hbm [resolvable:$true] %s865
          %868 = dma.vmem_to_hbm [thread:$0]  %s864, 128, %s866, %s848
        $region60: #{tpu_custom_call.1} parent=55 // pred_fallthru
          _
      $region56: #{tpu_custom_call.1} parent=5 // pred_fallthru
        _
      %p869 = scmp.le.s32.totalorder 2, %s27
      // Predicated region
      $region61: #{tpu_custom_call.1} parent=5 // pred_check
        %p870 = pneg %p869
      $region62: #{tpu_custom_call.1} parent=5 // pred_check_branch
        %872 = sbr.rel (%p870) target = $region64
      $region63: #{tpu_custom_call.1} parent=5 // pred_region
        %s873 = ssub.s32 %s27, 2
        // Predicated region
        $region65: #{tpu_custom_call.1} parent=63 // pred_check
          %p874 = pneg %p273
        $region66: #{tpu_custom_call.1} parent=63 // pred_check_branch
          %876 = sbr.rel (%p874) target = $region68
        $region67: #{tpu_custom_call.1} parent=63 // pred_region
          %s877 = sand.u32 %s258, 1
          %s878 = scalar_lea.sflag [#allocation5], %s877
          %s879 = sand.u32 %s258, 1
          %s880 = smul.addr %s879, 8
          %s881 = scalar_lea.vmem [#allocation4], %s880
          %883 = dma.done %s878, 128
        $region68: #{tpu_custom_call.1} parent=63 // pred_fallthru
          _
      $region64: #{tpu_custom_call.1} parent=5 // pred_fallthru
        _
    $region6: #{tpu_custom_call.1} parent=1 // loop_footer
      %s31 = sadd.s32 1, %s27
    $region7: #{tpu_custom_call.1} parent=1 // loop_footer_branch
      %26 = sbr.rel target = $region3
    $region8: #{tpu_custom_call.1} parent=1 // loop_exit
      _
    %884 = vsyncpa [#allocation5], 1
    %s885 = scalar_lea.sflag [#allocation5], 1
    %886 = vsyncpa %s885, 1

</llo_original>
